<compile_context>
chip_gen: v7x
topology: tpu7x:2x2x1
jax: 0.10.0
libtpu: 0.0.40
codegen_flags: <defaults>
</compile_context>

<pallas_src>
import jax
import jax.numpy as jnp
from jax.experimental import pallas as pl
from jax.experimental.pallas import tpu as pltpu  # noqa: F401  (TPU backend)


def _identity_kernel(x_ref, o_ref):
    # Output aliases the input buffer (input_output_aliases={0: 0}) and both
    # refs are left in HBM (memory_space=pl.ANY), so the output already holds
    # the correct data. Nothing to compute, nothing to copy.
    del x_ref, o_ref


def identity(x: jnp.ndarray) -> jnp.ndarray:
    """Pallas identity: returns an array equal to x (same shape & dtype).

    Zero-copy implementation: the output aliases the input HBM buffer and no
    auto-DMA is generated, so the kernel performs no memory traffic.
    """
    return pl.pallas_call(
        _identity_kernel,
        out_shape=jax.ShapeDtypeStruct(x.shape, x.dtype),
        in_specs=[pl.BlockSpec(memory_space=pl.ANY)],   # raw HBM ref, no auto-DMA
        out_specs=pl.BlockSpec(memory_space=pl.ANY),    # raw HBM ref, no auto-DMA
        input_output_aliases={0: 0},                    # output 0 aliases input 0
    )(x)


if __name__ == "__main__":
    key = jax.random.PRNGKey(0)
    # NCHW input, small shape consistent with a conv-net feature map.
    x = jax.random.normal(key, (2, 4, 16, 16), dtype=jnp.float32)

    y = identity(x)
    y = jax.block_until_ready(y)

    assert y.shape == x.shape
    assert y.dtype == x.dtype
    assert bool(jnp.all(y == x))

    print("KERNEL_OK")
</pallas_src>

<mosaic_0001>
module attributes {stable_mosaic.version = 11 : i64} {
  func.func @_identity_kernel(%arg0: memref<2x4x16x16xf32, #tpu.memory_space<any>>, %arg1: memref<2x4x16x16xf32, #tpu.memory_space<any>>) attributes {dimension_semantics = [], scalar_prefetch = 0 : i64, scratch_operands = 0 : i64, tpu.core_type = #tpu.core_type<tc>} {
    return
  }
}

</mosaic_0001>

<llo_original>
// kernel: tpu_custom_call.1
$region0: #{tpu_custom_call.1}
  #allocation0 [shape = 'u32[]', space=smem, size = 0x4, offset = 0x4, fixed_abs, tag = 'smem constant byte address 0x4 - core index']
  #allocation1 [shape = 'u32[144,128]{1,0:T(1,128)}', space=vmem, size = 0x12000, scoped, tag = 'internal scratch']
  %s0 = inlined_call_operand.hbm [shape: f32[2,4,16,16], index: 0, kind: input, shape index: {}, may-alias: {0,1}]
  %s1 = inlined_call_operand.hbm [shape: f32[2,4,16,16], index: 1, kind: output, shape index: {}, may-alias: {0,1}]
  %s2 = sld [smem:[#allocation0]]
  $region2: #{tpu_custom_call.1} parent=0
    _
  %s4 = ssub.s32 1, %s2
  %s5 = scalar_select 0, %s4, %s2

</llo_original>
